<compile_context>
chip_gen: v7x
topology: tpu7x:2x2x1
jax: 0.10.0
libtpu: 0.0.40
codegen_flags: <defaults>
</compile_context>

<pallas_src>
import functools

import jax
import jax.numpy as jnp
from jax.experimental import pallas as pl
from jax.experimental.pallas import tpu as pltpu


def _round_up(x: int, m: int) -> int:
    return (x + m - 1) // m * m


def _lora_kernel(x_ref, w_ref, b_ref, wa_ref, wb_ref, wna_ref, wnb_ref,
                 o_ref, acc_ref, xa_ref, *, use_new: bool):
    k = pl.program_id(1)

    @pl.when(k == 0)
    def _init():
        acc_ref[...] = jnp.zeros_like(acc_ref)
        xa_ref[...] = jnp.zeros_like(xa_ref)

    x = x_ref[...]
    # Partial sums over the K (input-feature) axis, f32 accumulation on the MXU.
    acc_ref[...] += jnp.dot(x, w_ref[...], preferred_element_type=jnp.float32)
    # Hoisted x @ A projection: accumulated once per row tile, reused below.
    xa_ref[...] += jnp.dot(x, wa_ref[...], preferred_element_type=jnp.float32)

    @pl.when(k == pl.num_programs(1) - 1)
    def _finalize():
        cdt = wb_ref.dtype  # MXU operand dtype (bf16 in the production path)
        lora1 = jnp.dot(xa_ref[...].astype(cdt), wb_ref[...],
                        preferred_element_type=jnp.float32)
        # Elementwise math stays f32 (bias is kept f32 in the wrapper).
        y = acc_ref[...] + b_ref[...].astype(jnp.float32) + lora1
        if use_new:
            # Second LoRA needs the FULL-width y -> output is not column-tiled.
            ya = jnp.dot(y.astype(cdt), wna_ref[...],
                         preferred_element_type=jnp.float32)
            y = y + jnp.dot(ya.astype(cdt), wnb_ref[...],
                            preferred_element_type=jnp.float32)
        o_ref[...] = y.astype(o_ref.dtype)


def prepare_lora_params(w, bias, w_a, w_b, wnew_a, wnew_b,
                        compute_dtype=jnp.bfloat16):
    """One-time parameter prep (call at load time, NOT per forward step):
    transpose PyTorch [out, in] weights to [in, out], zero-pad the LoRA rank to
    a lane-dense multiple of 128 (exact math), cast MXU operands to
    `compute_dtype`, keep the bias in f32."""
    D_out, D_in = w.shape
    r = w_a.shape[0]
    r_pad = max(128, _round_up(r, 128))

    def pad_rank(m, axis):
        widths = [(0, 0), (0, 0)]
        widths[axis] = (0, r_pad - m.shape[axis])
        return jnp.pad(m, widths)

    return dict(
        wT=w.T.astype(compute_dtype),                          # [D_in,  D_out]
        b2=bias.reshape(1, D_out).astype(jnp.float32),         # [1,     D_out]
        waT=pad_rank(w_a.T, 1).astype(compute_dtype),          # [D_in,  r_pad]
        wbT=pad_rank(w_b.T, 0).astype(compute_dtype),          # [r_pad, D_out]
        wnaT=pad_rank(wnew_a.T, 1).astype(compute_dtype),      # [D_out, r_pad]
        wnbT=pad_rank(wnew_b.T, 0).astype(compute_dtype),      # [r_pad, D_out]
    )


def lora_forward(x, params, *, use_new=True):
    """x: [..., D_in]; params from prepare_lora_params()."""
    *lead, D_in = x.shape
    M = 1
    for d in lead:
        M *= d

    cdt = params["wT"].dtype
    out_dtype = x.dtype
    D_out = params["wT"].shape[1]
    r_pad = params["waT"].shape[1]

    # --- tile selection ------------------------------------------------------
    sub = 16 if cdt == jnp.bfloat16 else 8      # sublane packing
    tm = _round_up(M, sub) if M <= 256 else 256  # big row tile, sublane-aligned
    M_pad = _round_up(M, tm)

    if D_in % 128 != 0 or D_in <= 512:
        tk = D_in                                # full-K (small / unaligned D)
    else:
        tk = next((c for c in (512, 384, 256, 128) if D_in % c == 0), D_in)
    n_m, n_k = M_pad // tm, D_in // tk

    x2 = x.reshape(M, D_in).astype(cdt)
    if M_pad != M:
        x2 = jnp.pad(x2, ((0, M_pad - M), (0, 0)))   # handle M % tm != 0

    # --- VMEM budget (double-buffered blocks + scratch), padded to (8,128) ----
    csz = params["wT"].dtype.itemsize
    osz = jnp.zeros((), out_dtype).dtype.itemsize

    def padded(s0, s1, itemsize):
        return _round_up(max(s0, 1), 8) * _round_up(max(s1, 1), 128) * itemsize

    est = (2 * padded(tm, tk, csz)             # x tile
           + 2 * padded(tk, D_out, csz)        # W^T K-slab
           + 2 * padded(1, D_out, 4)           # bias
           + 2 * padded(tk, r_pad, csz)        # A^T K-slab
           + 2 * padded(r_pad, D_out, csz)     # B^T
           + 2 * padded(D_out, r_pad, csz)     # Anew^T
           + 2 * padded(r_pad, D_out, csz)     # Bnew^T
           + 2 * padded(tm, D_out, osz)        # output tile
           + padded(tm, D_out, 4)              # f32 accumulator scratch
           + padded(tm, r_pad, 4))             # x@A scratch
    # Cap below v7x's 64 MiB physical VMEM; plenty of headroom on v5e/v6e.
    vmem_limit = int(min(max(2 * est, 32 << 20), 64 << 20))

    flops = (2 * M_pad * D_in * D_out          # base matmul
             + 2 * M_pad * D_in * r_pad        # x @ A
             + 2 * M_pad * r_pad * D_out)      # (xA) @ B
    if use_new:
        flops += 2 * M_pad * D_out * r_pad + 2 * M_pad * r_pad * D_out
    bytes_accessed = (M_pad * D_in * csz
                      + n_m * D_in * D_out * csz          # W re-read per row tile
                      + n_m * (D_in * r_pad + 3 * r_pad * D_out) * csz
                      + D_out * 4
                      + M_pad * D_out * osz)
    cost = pl.CostEstimate(flops=int(flops), transcendentals=0,
                           bytes_accessed=int(bytes_accessed))

    kernel = functools.partial(_lora_kernel, use_new=use_new)

    out = pl.pallas_call(
        kernel,
        out_shape=jax.ShapeDtypeStruct((M_pad, D_out), out_dtype),
        grid_spec=pltpu.PrefetchScalarGridSpec(
            num_scalar_prefetch=0,
            grid=(n_m, n_k),                                    # K axis last
            in_specs=[
                pl.BlockSpec((tm, tk), lambda i, k: (i, k)),        # x rows
                pl.BlockSpec((tk, D_out), lambda i, k: (k, 0)),     # W^T slab
                pl.BlockSpec((1, D_out), lambda i, k: (0, 0)),      # bias
                pl.BlockSpec((tk, r_pad), lambda i, k: (k, 0)),     # A^T slab
                pl.BlockSpec((r_pad, D_out), lambda i, k: (0, 0)),  # B^T
                pl.BlockSpec((D_out, r_pad), lambda i, k: (0, 0)),  # Anew^T
                pl.BlockSpec((r_pad, D_out), lambda i, k: (0, 0)),  # Bnew^T
            ],
            out_specs=pl.BlockSpec((tm, D_out), lambda i, k: (i, 0)),
            scratch_shapes=[
                pltpu.VMEM((tm, D_out), jnp.float32),   # base-path accumulator
                pltpu.VMEM((tm, r_pad), jnp.float32),   # hoisted x @ A
            ],
        ),
        compiler_params=pltpu.CompilerParams(
            dimension_semantics=("parallel", "arbitrary"),
            vmem_limit_bytes=vmem_limit,
        ),
        cost_estimate=cost,
    )(x2, params["wT"], params["b2"], params["waT"], params["wbT"],
      params["wnaT"], params["wnbT"])

    out = out[:M]
    return out.reshape(*lead, D_out)


def _reference(x, w, bias, w_a, w_b, wnew_a, wnew_b, use_new=True):
    # Pure-JAX reference matching PyTorch nn.Linear semantics.
    y = x @ w.T + bias + (x @ w_a.T) @ w_b.T
    if use_new:
        y = y + (y @ wnew_a.T) @ wnew_b.T
    return y


if __name__ == "__main__":
    key = jax.random.PRNGKey(0)
    B, S, D, r = 2, 7, 32, 4     # M = 14: exercises the row-padding path

    ks = jax.random.split(key, 7)
    x = jax.random.normal(ks[0], (B, S, D), jnp.float32)
    # PyTorch nn.Linear layout: [out_features, in_features]
    w = jax.random.normal(ks[1], (D, D), jnp.float32) * 0.05
    bias = jax.random.normal(ks[2], (D,), jnp.float32) * 0.05
    w_a = jax.random.normal(ks[3], (r, D), jnp.float32) * 0.05
    w_b = jax.random.normal(ks[4], (D, r), jnp.float32) * 0.05
    wnew_a = jax.random.normal(ks[5], (r, D), jnp.float32) * 0.05
    wnew_b = jax.random.normal(ks[6], (D, r), jnp.float32) * 0.05

    ref_new = _reference(x, w, bias, w_a, w_b, wnew_a, wnew_b, use_new=True)
    ref_old = _reference(x, w, bias, w_a, w_b, wnew_a, wnew_b, use_new=False)

    # f32 operands: tight structural check of the kernel (both use_new paths).
    p32 = prepare_lora_params(w, bias, w_a, w_b, wnew_a, wnew_b,
                              compute_dtype=jnp.float32)
    out32 = jax.block_until_ready(lora_forward(x, p32, use_new=True))
    assert out32.shape == (B, S, D)
    assert jnp.allclose(out32, ref_new, atol=1e-4, rtol=1e-4), "f32 mismatch"
    out32_no = jax.block_until_ready(lora_forward(x, p32, use_new=False))
    assert jnp.allclose(out32_no, ref_old, atol=1e-4, rtol=1e-4), "f32 (no new) mismatch"

    # bf16 MXU operands (production path, f32 accumulation): looser tolerance.
    pbf = prepare_lora_params(w, bias, w_a, w_b, wnew_a, wnew_b,
                              compute_dtype=jnp.bfloat16)
    outbf = jax.block_until_ready(lora_forward(x, pbf, use_new=True))
    assert outbf.shape == (B, S, D)
    assert jnp.allclose(outbf, ref_new, atol=5e-2, rtol=5e-2), "bf16 mismatch"

    print("KERNEL_OK")
</pallas_src>

<mosaic_0001>
module attributes {stable_mosaic.version = 11 : i64} {
  func.func @_lora_kernel(%arg0: i32, %arg1: i32, %arg2: memref<16x32xf32, #tpu.memory_space<vmem>>, %arg3: memref<32x32xf32, #tpu.memory_space<vmem>>, %arg4: memref<1x32xf32, #tpu.memory_space<vmem>>, %arg5: memref<32x128xf32, #tpu.memory_space<vmem>>, %arg6: memref<128x32xf32, #tpu.memory_space<vmem>>, %arg7: memref<32x128xf32, #tpu.memory_space<vmem>>, %arg8: memref<128x32xf32, #tpu.memory_space<vmem>>, %arg9: memref<16x32xf32, #tpu.memory_space<vmem>>, %arg10: memref<16x32xf32, #tpu.memory_space<vmem>>, %arg11: memref<16x128xf32, #tpu.memory_space<vmem>>) attributes {dimension_semantics = [#tpu.dimension_semantics<parallel>, #tpu.dimension_semantics<arbitrary>], iteration_bounds = array<i64: 1, 1>, scalar_prefetch = 0 : i64, scratch_operands = 2 : i64, tpu.core_type = #tpu.core_type<tc>, window_params = [{transform_indices = @transform_0, window_bounds = array<i64: 16, 32>}, {transform_indices = @transform_1, window_bounds = array<i64: 32, 32>}, {pipeline_mode = #tpu.pipeline_mode<synchronous>, transform_indices = @transform_2, window_bounds = array<i64: 1, 32>}, {transform_indices = @transform_3, window_bounds = array<i64: 32, 128>}, {pipeline_mode = #tpu.pipeline_mode<synchronous>, transform_indices = @transform_4, window_bounds = array<i64: 128, 32>}, {pipeline_mode = #tpu.pipeline_mode<synchronous>, transform_indices = @transform_5, window_bounds = array<i64: 32, 128>}, {pipeline_mode = #tpu.pipeline_mode<synchronous>, transform_indices = @transform_6, window_bounds = array<i64: 128, 32>}, {transform_indices = @transform_7, window_bounds = array<i64: 16, 32>}]} {
    %c0_i32 = arith.constant 0 : i32
    %0 = arith.cmpi eq, %arg1, %c0_i32 : i32
    %1 = arith.extui %0 : i1 to i32
    %c0_i32_0 = arith.constant 0 : i32
    %2 = arith.cmpi ne, %1, %c0_i32_0 : i32
    scf.if %2 {
      %cst_17 = arith.constant 0.000000e+00 : f32
      %17 = vector.broadcast %cst_17 : f32 to vector<16x32xf32>
      %c0_18 = arith.constant 0 : index
      %c0_19 = arith.constant 0 : index
      %18 = vector.load %arg10[%c0_18, %c0_19] : memref<16x32xf32, #tpu.memory_space<vmem>>, vector<16x32xf32>
      tpu.vector_store %arg10[%c0_18, %c0_19], %17 {strides = array<i32>} : memref<16x32xf32, #tpu.memory_space<vmem>>, vector<16x32xf32>,
      %cst_20 = arith.constant 0.000000e+00 : f32
      %19 = vector.broadcast %cst_20 : f32 to vector<16x128xf32>
      %c0_21 = arith.constant 0 : index
      %c0_22 = arith.constant 0 : index
      %20 = vector.load %arg11[%c0_21, %c0_22] : memref<16x128xf32, #tpu.memory_space<vmem>>, vector<16x128xf32>
      tpu.vector_store %arg11[%c0_21, %c0_22], %19 {strides = array<i32>} : memref<16x128xf32, #tpu.memory_space<vmem>>, vector<16x128xf32>,
    } else {
    }
    %c0 = arith.constant 0 : index
    %c0_1 = arith.constant 0 : index
    %3 = vector.load %arg2[%c0, %c0_1] : memref<16x32xf32, #tpu.memory_space<vmem>>, vector<16x32xf32>
    %c0_2 = arith.constant 0 : index
    %c0_3 = arith.constant 0 : index
    %4 = vector.load %arg10[%c0_2, %c0_3] : memref<16x32xf32, #tpu.memory_space<vmem>>, vector<16x32xf32>
    %c0_4 = arith.constant 0 : index
    %c0_5 = arith.constant 0 : index
    %5 = vector.load %arg3[%c0_4, %c0_5] : memref<32x32xf32, #tpu.memory_space<vmem>>, vector<32x32xf32>
    %cst = arith.constant dense<0.000000e+00> : vector<16x32xf32>
    %6 = tpu.matmul %3, %5, %cst {dimension_numbers = #tpu.dot_dimension_numbers<[1], [0], [0], [1], [0, 0, 1, 1], [], []>} : vector<16x32xf32>, vector<32x32xf32>, vector<16x32xf32> -> vector<16x32xf32>
    %7 = arith.addf %4, %6 : vector<16x32xf32>
    %c0_6 = arith.constant 0 : index
    %c0_7 = arith.constant 0 : index
    %8 = vector.load %arg10[%c0_6, %c0_7] : memref<16x32xf32, #tpu.memory_space<vmem>>, vector<16x32xf32>
    tpu.vector_store %arg10[%c0_6, %c0_7], %7 {strides = array<i32>} : memref<16x32xf32, #tpu.memory_space<vmem>>, vector<16x32xf32>,
    %c0_8 = arith.constant 0 : index
    %c0_9 = arith.constant 0 : index
    %9 = vector.load %arg11[%c0_8, %c0_9] : memref<16x128xf32, #tpu.memory_space<vmem>>, vector<16x128xf32>
    %c0_10 = arith.constant 0 : index
    %c0_11 = arith.constant 0 : index
    %10 = vector.load %arg5[%c0_10, %c0_11] : memref<32x128xf32, #tpu.memory_space<vmem>>, vector<32x128xf32>
    %cst_12 = arith.constant dense<0.000000e+00> : vector<16x128xf32>
    %11 = tpu.matmul %3, %10, %cst_12 {dimension_numbers = #tpu.dot_dimension_numbers<[1], [0], [0], [1], [0, 0, 1, 1], [], []>} : vector<16x32xf32>, vector<32x128xf32>, vector<16x128xf32> -> vector<16x128xf32>
    %12 = arith.addf %9, %11 : vector<16x128xf32>
    %c0_13 = arith.constant 0 : index
    %c0_14 = arith.constant 0 : index
    %13 = vector.load %arg11[%c0_13, %c0_14] : memref<16x128xf32, #tpu.memory_space<vmem>>, vector<16x128xf32>
    tpu.vector_store %arg11[%c0_13, %c0_14], %12 {strides = array<i32>} : memref<16x128xf32, #tpu.memory_space<vmem>>, vector<16x128xf32>,
    %c0_i32_15 = arith.constant 0 : i32
    %14 = arith.cmpi eq, %arg1, %c0_i32_15 : i32
    %15 = arith.extui %14 : i1 to i32
    %c0_i32_16 = arith.constant 0 : i32
    %16 = arith.cmpi ne, %15, %c0_i32_16 : i32
    scf.if %16 {
      %c0_17 = arith.constant 0 : index
      %c0_18 = arith.constant 0 : index
      %17 = vector.load %arg11[%c0_17, %c0_18] : memref<16x128xf32, #tpu.memory_space<vmem>>, vector<16x128xf32>
      %c0_19 = arith.constant 0 : index
      %c0_20 = arith.constant 0 : index
      %18 = vector.load %arg6[%c0_19, %c0_20] : memref<128x32xf32, #tpu.memory_space<vmem>>, vector<128x32xf32>
      %cst_21 = arith.constant dense<0.000000e+00> : vector<16x32xf32>
      %19 = tpu.matmul %17, %18, %cst_21 {dimension_numbers = #tpu.dot_dimension_numbers<[1], [0], [0], [1], [0, 0, 1, 1], [], []>} : vector<16x128xf32>, vector<128x32xf32>, vector<16x32xf32> -> vector<16x32xf32>
      %c0_22 = arith.constant 0 : index
      %c0_23 = arith.constant 0 : index
      %20 = vector.load %arg10[%c0_22, %c0_23] : memref<16x32xf32, #tpu.memory_space<vmem>>, vector<16x32xf32>
      %c0_24 = arith.constant 0 : index
      %c0_25 = arith.constant 0 : index
      %21 = vector.load %arg4[%c0_24, %c0_25] : memref<1x32xf32, #tpu.memory_space<vmem>>, vector<1x32xf32>
      %22 = vector.broadcast %21 : vector<1x32xf32> to vector<16x32xf32>
      %23 = arith.addf %20, %22 : vector<16x32xf32>
      %24 = arith.addf %23, %19 : vector<16x32xf32>
      %c0_26 = arith.constant 0 : index
      %c0_27 = arith.constant 0 : index
      %25 = vector.load %arg7[%c0_26, %c0_27] : memref<32x128xf32, #tpu.memory_space<vmem>>, vector<32x128xf32>
      %cst_28 = arith.constant dense<0.000000e+00> : vector<16x128xf32>
      %26 = tpu.matmul %24, %25, %cst_28 {dimension_numbers = #tpu.dot_dimension_numbers<[1], [0], [0], [1], [0, 0, 1, 1], [], []>} : vector<16x32xf32>, vector<32x128xf32>, vector<16x128xf32> -> vector<16x128xf32>
      %c0_29 = arith.constant 0 : index
      %c0_30 = arith.constant 0 : index
      %27 = vector.load %arg8[%c0_29, %c0_30] : memref<128x32xf32, #tpu.memory_space<vmem>>, vector<128x32xf32>
      %cst_31 = arith.constant dense<0.000000e+00> : vector<16x32xf32>
      %28 = tpu.matmul %26, %27, %cst_31 {dimension_numbers = #tpu.dot_dimension_numbers<[1], [0], [0], [1], [0, 0, 1, 1], [], []>} : vector<16x128xf32>, vector<128x32xf32>, vector<16x32xf32> -> vector<16x32xf32>
      %29 = arith.addf %24, %28 : vector<16x32xf32>
      %c0_32 = arith.constant 0 : index
      %c0_33 = arith.constant 0 : index
      %30 = vector.load %arg9[%c0_32, %c0_33] : memref<16x32xf32, #tpu.memory_space<vmem>>, vector<16x32xf32>
      tpu.vector_store %arg9[%c0_32, %c0_33], %29 {strides = array<i32>} : memref<16x32xf32, #tpu.memory_space<vmem>>, vector<16x32xf32>,
    } else {
    }
    return
  }
  func.func @transform_0(%arg0: i32, %arg1: i32) -> (i32, i32) {
    %c0_i32 = arith.constant 0 : i32
    return %arg0, %arg1 : i32, i32
  }
  func.func @transform_1(%arg0: i32, %arg1: i32) -> (i32, i32) {
    %c0_i32 = arith.constant 0 : i32
    %c0_i32_0 = arith.constant 0 : i32
    return %arg1, %c0_i32 : i32, i32
  }
  func.func @transform_2(%arg0: i32, %arg1: i32) -> (i32, i32) {
    %c0_i32 = arith.constant 0 : i32
    %c0_i32_0 = arith.constant 0 : i32
    %c0_i32_1 = arith.constant 0 : i32
    return %c0_i32, %c0_i32_0 : i32, i32
  }
  func.func @transform_3(%arg0: i32, %arg1: i32) -> (i32, i32) {
    %c0_i32 = arith.constant 0 : i32
    %c0_i32_0 = arith.constant 0 : i32
    return %arg1, %c0_i32 : i32, i32
  }
  func.func @transform_4(%arg0: i32, %arg1: i32) -> (i32, i32) {
    %c0_i32 = arith.constant 0 : i32
    %c0_i32_0 = arith.constant 0 : i32
    %c0_i32_1 = arith.constant 0 : i32
    return %c0_i32, %c0_i32_0 : i32, i32
  }
  func.func @transform_5(%arg0: i32, %arg1: i32) -> (i32, i32) {
    %c0_i32 = arith.constant 0 : i32
    %c0_i32_0 = arith.constant 0 : i32
    %c0_i32_1 = arith.constant 0 : i32
    return %c0_i32, %c0_i32_0 : i32, i32
  }
  func.func @transform_6(%arg0: i32, %arg1: i32) -> (i32, i32) {
    %c0_i32 = arith.constant 0 : i32
    %c0_i32_0 = arith.constant 0 : i32
    %c0_i32_1 = arith.constant 0 : i32
    return %c0_i32, %c0_i32_0 : i32, i32
  }
  func.func @transform_7(%arg0: i32, %arg1: i32) -> (i32, i32) {
    %c0_i32 = arith.constant 0 : i32
    %c0_i32_0 = arith.constant 0 : i32
    return %arg0, %c0_i32 : i32, i32
  }
}

</mosaic_0001>

<llo_original>
// kernel: tpu_custom_call.1
$region0: #{tpu_custom_call.1}
  #allocation0 [shape = 'u32[]', space=smem, size = 0x4, offset = 0x4, fixed_abs, tag = 'smem constant byte address 0x4 - core index']
  #allocation1 [shape = 'u32[144,128]{1,0:T(1,128)}', space=vmem, size = 0x12000, scoped, tag = 'internal scratch']
  #allocation2 [shape = 'f32[16,32]{1,0:T(8,128)}', space=vmem, size = 0x2000, scoped, tag = 'scratch operand']
  #allocation3 [shape = 'f32[16,128]{1,0:T(8,128)}', space=vmem, size = 0x2000, scoped, tag = 'scratch operand']
  %s0 = inlined_call_operand.vmem [shape: f32[16,32], index: 0, kind: input, shape index: {}]
  %s1 = inlined_call_operand.vmem [shape: f32[32,32], index: 1, kind: input, shape index: {}]
  %s2 = inlined_call_operand.vmem [shape: f32[1,32], index: 2, kind: input, shape index: {}]
  %s3 = inlined_call_operand.vmem [shape: f32[32,128], index: 3, kind: input, shape index: {}]
  %s4 = inlined_call_operand.vmem [shape: f32[128,32], index: 4, kind: input, shape index: {}]
  %s5 = inlined_call_operand.vmem [shape: f32[32,128], index: 5, kind: input, shape index: {}]
  %s6 = inlined_call_operand.vmem [shape: f32[128,32], index: 6, kind: input, shape index: {}]
  %s7 = inlined_call_operand.hbm [shape: f32[16,32], index: 7, kind: output, shape index: {}]
  %s8 = sld [smem:[#allocation0]]
  $region46: #{tpu_custom_call.1} parent=0
    _
  %s10 = ssub.s32 1, %s8
  %s11 = scalar_select 0, %s10, %s8
  $region1: #{tpu_custom_call.1} parent=0
    #allocation4 [shape = 'u8[8192]{0}', space=vmem, size = 0x2000, scoped, tag = 'output window, operand 0, single buffered']
    #allocation5 [shape = 's32[1]{0}', space=sflag, size = 0x4, scoped, tag = 'scoped memory for tpu_custom_call.1']
    %12 = vsyncpa [#allocation5], 0
    // Predicated region
    $region2: #{tpu_custom_call.1} parent=1 // pred_check
      _
    $region3: #{tpu_custom_call.1} parent=1 // pred_check_branch
      %14 = sbr.rel (0) target = $region5
    $region4: #{tpu_custom_call.1} parent=1 // pred_region
      _
    $region5: #{tpu_custom_call.1} parent=1 // pred_fallthru
      _
    // Predicated region
    $region6: #{tpu_custom_call.1} parent=1 // pred_check
      _
    $region7: #{tpu_custom_call.1} parent=1 // pred_check_branch
      %16 = sbr.rel (0) target = $region9
    $region8: #{tpu_custom_call.1} parent=1 // pred_region
      _
    $region9: #{tpu_custom_call.1} parent=1 // pred_fallthru
      _
    // Predicated region
    $region10: #{tpu_custom_call.1} parent=1 // pred_check
      _
    $region11: #{tpu_custom_call.1} parent=1 // pred_check_branch
      %18 = sbr.rel (0) target = $region13
    $region12: #{tpu_custom_call.1} parent=1 // pred_region
      _
    $region13: #{tpu_custom_call.1} parent=1 // pred_fallthru
      _
    // Predicated region
    $region14: #{tpu_custom_call.1} parent=1 // pred_check
      _
    $region15: #{tpu_custom_call.1} parent=1 // pred_check_branch
      %20 = sbr.rel (0) target = $region17
    $region16: #{tpu_custom_call.1} parent=1 // pred_region
      _
    $region17: #{tpu_custom_call.1} parent=1 // pred_fallthru
      _
    // Predicated region
    $region18: #{tpu_custom_call.1} parent=1 // pred_check
      _
    $region19: #{tpu_custom_call.1} parent=1 // pred_check_branch
      %22 = sbr.rel (0) target = $region21
    $region20: #{tpu_custom_call.1} parent=1 // pred_region
      _
    $region21: #{tpu_custom_call.1} parent=1 // pred_fallthru
      _
    // Predicated region
    $region22: #{tpu_custom_call.1} parent=1 // pred_check
      _
    $region23: #{tpu_custom_call.1} parent=1 // pred_check_branch
      %24 = sbr.rel (0) target = $region25
    $region24: #{tpu_custom_call.1} parent=1 // pred_region
      _
    $region25: #{tpu_custom_call.1} parent=1 // pred_fallthru
      _
    // Predicated region
    $region26: #{tpu_custom_call.1} parent=1 // pred_check
      _
    $region27: #{tpu_custom_call.1} parent=1 // pred_check_branch
      %26 = sbr.rel (0) target = $region29
    $region28: #{tpu_custom_call.1} parent=1 // pred_region
      _
    $region29: #{tpu_custom_call.1} parent=1 // pred_fallthru
      _
    %p27 = scmp.eq.s32.totalorder 0, 0
    // Predicated region
    $region30: #{tpu_custom_call.1} parent=1 // pred_check
      %p28 = pneg %p27
    $region31: #{tpu_custom_call.1} parent=1 // pred_check_branch
      %30 = sbr.rel (%p28) target = $region33
    $region32: #{tpu_custom_call.1} parent=1 // pred_region
      %vm31 = vcmask 261120
      %32 = vst.msk [vmem:[#allocation2] sm:$0xff] %vm31, 0.0
      %33 = vst.msk [vmem:[#allocation2 + $0x8] sm:$0xff] %vm31, 0.0
      %34 = vst [vmem:[#allocation3] sm:$0xff] 0.0
      %35 = vst [vmem:[#allocation3 + $0x8] sm:$0xff] 0.0
    $region33: #{tpu_custom_call.1} parent=1 // pred_fallthru
      _
    %v36 = vld [vmem:[%s0] sm:$0xff]
    %v37 = vld [vmem:[%s0 + $0x8] sm:$0xff]
    %v38 = vld [vmem:[#allocation2] sm:$0xff]
    %v39 = vld [vmem:[#allocation2 + $0x8] sm:$0xff]
    %v40 = vld [vmem:[%s1] sm:$0xff]
    %v41 = vld [vmem:[%s1 + $0x8] sm:$0xff]
    %v42 = vld [vmem:[%s1 + $0x10] sm:$0xff]
    %v43 = vld [vmem:[%s1 + $0x18] sm:$0xff]
    %vm44 = vcmask 261120
    %v46 = vsel %vm44, %v36, 0
    %v49 = vsel %vm44, %v37, 0
    %51 = vmatprep.subr.mxu0 0.0
    %52 = vmatpush1.msra.mxu0 %v40
    %53 = vmatprep.subr.mxu0 0.0
    %54 = vmatpush1.msra.mxu0 %v41
    %55 = vmatprep.subr.mxu0 0.0
    %56 = vmatpush1.msra.mxu0 %v42
    %57 = vmatprep.subr.mxu0 0.0
    %58 = vmatpush1.msra.mxu0 %v43
    %59 = vmatprep.subr.mxu0 0.0
    %60 = vmatpush1.msra.mxu0 0.0
    %61 = vmatprep.subr.mxu0 0.0
    %62 = vmatpush1.msra.mxu0 0.0
    %63 = vmatprep.subr.mxu0 0.0
    %64 = vmatpush1.msra.mxu0 0.0
    %65 = vmatprep.subr.mxu0 0.0
    %66 = vmatpush1.msra.mxu0 0.0
    %67 = vmatprep.subr.mxu0 0.0
    %68 = vmatpush1.msra.mxu0 0.0
    %69 = vmatprep.subr.mxu0 0.0
    %70 = vmatpush1.msra.mxu0 0.0
    %71 = vmatprep.subr.mxu0 0.0
    %72 = vmatpush1.msra.mxu0 0.0
    %73 = vmatprep.subr.mxu0 0.0
    %74 = vmatpush1.msra.mxu0 0.0
    %75 = vmatprep.subr.mxu0 0.0
    %76 = vmatpush1.msra.mxu0 0.0
    %77 = vmatprep.subr.mxu0 0.0
    %78 = vmatpush1.msra.mxu0 0.0
    %79 = vmatprep.subr.mxu0 0.0
    %80 = vmatpush1.msra.mxu0 0.0
    %81 = vmatprep.subr.mxu0 0.0
    %82 = vmatpush1.msra.mxu0 0.0
    %83 = vmatprep.subr.mxu0 0.0
    %84 = vmatpush1.msra.mxu0 0.0
    %85 = vmatprep.subr.mxu0 0.0
    %86 = vmatpush1.msra.mxu0 0.0
    %87 = vmatprep.subr.mxu0 0.0
    %88 = vmatpush1.msra.mxu0 0.0
    %89 = vmatprep.subr.mxu0 0.0
    %90 = vmatpush1.msra.mxu0 0.0
    %91 = vmatprep.subr.mxu0 0.0
    %92 = vmatpush1.msra.mxu0 0.0
    %93 = vmatprep.subr.mxu0 0.0
    %94 = vmatpush1.msra.mxu0 0.0
    %95 = vmatprep.subr.mxu0 0.0
    %96 = vmatpush1.msra.mxu0 0.0
    %97 = vmatprep.subr.mxu0 0.0
    %98 = vmatpush1.msra.mxu0 0.0
    %99 = vmatprep.subr.mxu0 0.0
    %100 = vmatpush1.msra.mxu0 0.0
    %101 = vmatprep.subr.mxu0 0.0
    %102 = vmatpush1.msra.mxu0 0.0
    %103 = vmatprep.subr.mxu0 0.0
    %104 = vmatpush1.msra.mxu0 0.0
    %105 = vmatprep.subr.mxu0 0.0
    %106 = vmatpush1.msra.mxu0 0.0
    %107 = vmatprep.subr.mxu0 0.0
    %108 = vmatpush1.msra.mxu0 0.0
    %109 = vmatprep.subr.mxu0 0.0
    %110 = vmatpush1.msra.mxu0 0.0
    %111 = vmatprep.subr.mxu0 0.0
    %112 = vmatpush1.msra.mxu0 0.0
    %113 = vmatprep.subr.mxu0 0.0
    %114 = vmatpush1.msra.mxu0 0.0
    %115 = vmatprep.mubr.f32.mxu0 0.0
    %116 = vmatmul.mubr.f32.gmra.mrb[0].mxu0 %v46
    %v117 = vpop.f32.mrb[0].mxu0
    %v118 = vadd.f32 0.0, %v117
    %v119 = vpop.f32.mrb[0].mxu0
    %120 = vmatprep.mubr.f32.mxu0 0.0
    %121 = vmatmul.mubr.f32.gmra.mrb[0].mxu0 %v49
    %v122 = vpop.f32.mrb[0].mxu0
    %v123 = vadd.f32 0.0, %v122
    %v124 = vpop.f32.mrb[0].mxu0
    %125 = vdwg.mxu0
    %v126 = vadd.f32 %v38, %v118
    %v127 = vadd.f32 %v39, %v123
    %128 = vst.msk [vmem:[#allocation2] sm:$0xff] %vm44, %v126
    %129 = vst.msk [vmem:[#allocation2 + $0x8] sm:$0xff] %vm44, %v127
    %v130 = vld [vmem:[#allocation3] sm:$0xff]
    %v131 = vld [vmem:[#allocation3 + $0x8] sm:$0xff]
    %v132 = vld [vmem:[%s3] sm:$0xff]
    %v133 = vld [vmem:[%s3 + $0x8] sm:$0xff]
    %v134 = vld [vmem:[%s3 + $0x10] sm:$0xff]
    %v135 = vld [vmem:[%s3 + $0x18] sm:$0xff]
    %136 = vmatprep.subr.mxu0 0.0
    %137 = vmatpush1.msra.mxu0 %v132
    %138 = vmatprep.subr.mxu0 0.0
    %139 = vmatpush1.msra.mxu0 %v133
    %140 = vmatprep.subr.mxu0 0.0
    %141 = vmatpush1.msra.mxu0 %v134
    %142 = vmatprep.subr.mxu0 0.0
    %143 = vmatpush1.msra.mxu0 %v135
    %144 = vmatprep.subr.mxu0 0.0
    %145 = vmatpush1.msra.mxu0 0.0
    %146 = vmatprep.subr.mxu0 0.0
    %147 = vmatpush1.msra.mxu0 0.0
    %148 = vmatprep.subr.mxu0 0.0
    %149 = vmatpush1.msra.mxu0 0.0
    %150 = vmatprep.subr.mxu0 0.0
    %151 = vmatpush1.msra.mxu0 0.0
    %152 = vmatprep.subr.mxu0 0.0
    %153 = vmatpush1.msra.mxu0 0.0
    %154 = vmatprep.subr.mxu0 0.0
    %155 = vmatpush1.msra.mxu0 0.0
    %156 = vmatprep.subr.mxu0 0.0
    %157 = vmatpush1.msra.mxu0 0.0
    %158 = vmatprep.subr.mxu0 0.0
    %159 = vmatpush1.msra.mxu0 0.0
    %160 = vmatprep.subr.mxu0 0.0
    %161 = vmatpush1.msra.mxu0 0.0
    %162 = vmatprep.subr.mxu0 0.0
    %163 = vmatpush1.msra.mxu0 0.0
    %164 = vmatprep.subr.mxu0 0.0
    %165 = vmatpush1.msra.mxu0 0.0
    %166 = vmatprep.subr.mxu0 0.0
    %167 = vmatpush1.msra.mxu0 0.0
    %168 = vmatprep.subr.mxu0 0.0
    %169 = vmatpush1.msra.mxu0 0.0
    %170 = vmatprep.subr.mxu0 0.0
    %171 = vmatpush1.msra.mxu0 0.0
    %172 = vmatprep.subr.mxu0 0.0
    %173 = vmatpush1.msra.mxu0 0.0
    %174 = vmatprep.subr.mxu0 0.0
    %175 = vmatpush1.msra.mxu0 0.0
    %176 = vmatprep.subr.mxu0 0.0
    %177 = vmatpush1.msra.mxu0 0.0
    %178 = vmatprep.subr.mxu0 0.0
    %179 = vmatpush1.msra.mxu0 0.0
    %180 = vmatprep.subr.mxu0 0.0
    %181 = vmatpush1.msra.mxu0 0.0
    %182 = vmatprep.subr.mxu0 0.0
    %183 = vmatpush1.msra.mxu0 0.0
    %184 = vmatprep.subr.mxu0 0.0
    %185 = vmatpush1.msra.mxu0 0.0
    %186 = vmatprep.subr.mxu0 0.0
    %187 = vmatpush1.msra.mxu0 0.0
    %188 = vmatprep.subr.mxu0 0.0
    %189 = vmatpush1.msra.mxu0 0.0
    %190 = vmatprep.subr.mxu0 0.0
    %191 = vmatpush1.msra.mxu0 0.0
    %192 = vmatprep.subr.mxu0 0.0
    %193 = vmatpush1.msra.mxu0 0.0
    %194 = vmatprep.subr.mxu0 0.0
    %195 = vmatpush1.msra.mxu0 0.0
    %196 = vmatprep.subr.mxu0 0.0
    %197 = vmatpush1.msra.mxu0 0.0
    %198 = vmatprep.subr.mxu0 0.0
    %199 = vmatpush1.msra.mxu0 0.0
    %200 = vmatprep.mubr.f32.mxu0 0.0
    %201 = vmatmul.mubr.f32.gmra.mrb[0].mxu0 %v46
    %v202 = vpop.f32.mrb[0].mxu0
    %v203 = vadd.f32 0.0, %v202
    %v204 = vpop.f32.mrb[0].mxu0
    %205 = vmatprep.mubr.f32.mxu0 0.0
    %206 = vmatmul.mubr.f32.gmra.mrb[0].mxu0 %v49
    %v207 = vpop.f32.mrb[0].mxu0
    %v208 = vadd.f32 0.0, %v207
    %v209 = vpop.f32.mrb[0].mxu0
    %210 = vdwg.mxu0
    %v211 = vadd.f32 %v130, %v203
    %v212 = vadd.f32 %v131, %v208
    %213 = vst [vmem:[#allocation3] sm:$0xff] %v211
    %214 = vst [vmem:[#allocation3 + $0x8] sm:$0xff] %v212
    // Predicated region
    $region34: #{tpu_custom_call.1} parent=1 // pred_check
      %p215 = pneg %p27
    $region35: #{tpu_custom_call.1} parent=1 // pred_check_branch
      %217 = sbr.rel (%p215) target = $region37
    $region36: #{tpu_custom_call.1} parent=1 // pred_region
      %v218 = vld [vmem:[#allocation3] sm:$0xff]
      %v219 = vld [vmem:[#allocation3 + $0x8] sm:$0xff]
      %v220 = vld [vmem:[%s4] sm:$0xff]
      %v221 = vld [vmem:[%s4 + $0x8] sm:$0xff]
      %v222 = vld [vmem:[%s4 + $0x10] sm:$0xff]
      %v223 = vld [vmem:[%s4 + $0x18] sm:$0xff]
      %v224 = vld [vmem:[%s4 + $0x20] sm:$0xff]
      %v225 = vld [vmem:[%s4 + $0x28] sm:$0xff]
      %v226 = vld [vmem:[%s4 + $0x30] sm:$0xff]
      %v227 = vld [vmem:[%s4 + $0x38] sm:$0xff]
      %v228 = vld [vmem:[%s4 + $0x40] sm:$0xff]
      %v229 = vld [vmem:[%s4 + $0x48] sm:$0xff]
      %v230 = vld [vmem:[%s4 + $0x50] sm:$0xff]
      %v231 = vld [vmem:[%s4 + $0x58] sm:$0xff]
      %v232 = vld [vmem:[%s4 + $0x60] sm:$0xff]
      %v233 = vld [vmem:[%s4 + $0x68] sm:$0xff]
      %v234 = vld [vmem:[%s4 + $0x70] sm:$0xff]
      %v235 = vld [vmem:[%s4 + $0x78] sm:$0xff]
      %236 = vmatprep.subr.mxu0 0.0
      %237 = vmatpush1.msra.mxu0 %v220
      %238 = vmatprep.subr.mxu0 0.0
      %239 = vmatpush1.msra.mxu0 %v221
      %240 = vmatprep.subr.mxu0 0.0
      %241 = vmatpush1.msra.mxu0 %v222
      %242 = vmatprep.subr.mxu0 0.0
      %243 = vmatpush1.msra.mxu0 %v223
      %244 = vmatprep.subr.mxu0 0.0
      %245 = vmatpush1.msra.mxu0 %v224
      %246 = vmatprep.subr.mxu0 0.0
      %247 = vmatpush1.msra.mxu0 %v225
      %248 = vmatprep.subr.mxu0 0.0
      %249 = vmatpush1.msra.mxu0 %v226
      %250 = vmatprep.subr.mxu0 0.0
      %251 = vmatpush1.msra.mxu0 %v227
      %252 = vmatprep.subr.mxu0 0.0
      %253 = vmatpush1.msra.mxu0 %v228
      %254 = vmatprep.subr.mxu0 0.0
      %255 = vmatpush1.msra.mxu0 %v229
      %256 = vmatprep.subr.mxu0 0.0
      %257 = vmatpush1.msra.mxu0 %v230
      %258 = vmatprep.subr.mxu0 0.0
      %259 = vmatpush1.msra.mxu0 %v231
      %260 = vmatprep.subr.mxu0 0.0
      %261 = vmatpush1.msra.mxu0 %v232
      %262 = vmatprep.subr.mxu0 0.0
      %263 = vmatpush1.msra.mxu0 %v233
      %264 = vmatprep.subr.mxu0 0.0
      %265 = vmatpush1.msra.mxu0 %v234
      %266 = vmatprep.subr.mxu0 0.0
      %267 = vmatpush1.msra.mxu0 %v235
      %268 = vmatprep.subr.mxu0 0.0
      %269 = vmatpush1.msra.mxu0 0.0
      %270 = vmatprep.subr.mxu0 0.0
      %271 = vmatpush1.msra.mxu0 0.0
      %272 = vmatprep.subr.mxu0 0.0
      %273 = vmatpush1.msra.mxu0 0.0
      %274 = vmatprep.subr.mxu0 0.0
      %275 = vmatpush1.msra.mxu0 0.0
      %276 = vmatprep.subr.mxu0 0.0
      %277 = vmatpush1.msra.mxu0 0.0
      %278 = vmatprep.subr.mxu0 0.0
      %279 = vmatpush1.msra.mxu0 0.0
      %280 = vmatprep.subr.mxu0 0.0
      %281 = vmatpush1.msra.mxu0 0.0
      %282 = vmatprep.subr.mxu0 0.0
      %283 = vmatpush1.msra.mxu0 0.0
      %284 = vmatprep.subr.mxu0 0.0
      %285 = vmatpush1.msra.mxu0 0.0
      %286 = vmatprep.subr.mxu0 0.0
      %287 = vmatpush1.msra.mxu0 0.0
      %288 = vmatprep.subr.mxu0 0.0
      %289 = vmatpush1.msra.mxu0 0.0
      %290 = vmatprep.subr.mxu0 0.0
      %291 = vmatpush1.msra.mxu0 0.0
      %292 = vmatprep.subr.mxu0 0.0
      %293 = vmatpush1.msra.mxu0 0.0
      %294 = vmatprep.subr.mxu0 0.0
      %295 = vmatpush1.msra.mxu0 0.0
      %296 = vmatprep.subr.mxu0 0.0
      %297 = vmatpush1.msra.mxu0 0.0
      %298 = vmatprep.subr.mxu0 0.0
      %299 = vmatpush1.msra.mxu0 0.0
      %300 = vmatprep.mubr.f32.mxu0 0.0
      %301 = vmatmul.mubr.f32.gmra.mrb[0].mxu0 %v218
      %v302 = vpop.f32.mrb[0].mxu0
      %v303 = vadd.f32 0.0, %v302
      %v304 = vpop.f32.mrb[0].mxu0
      %305 = vmatprep.mubr.f32.mxu0 0.0
      %306 = vmatmul.mubr.f32.gmra.mrb[0].mxu0 %v219
      %v307 = vpop.f32.mrb[0].mxu0
      %v308 = vadd.f32 0.0, %v307
      %v309 = vpop.f32.mrb[0].mxu0
      %310 = vdwg.mxu0
      %v311 = vld [vmem:[#allocation2] sm:$0xff]
      %v312 = vld [vmem:[#allocation2 + $0x8] sm:$0xff]
      %v313 = vld [vmem:[%s2] sm:$0x1]
      %v315 = vlaneseq
      %v316 = vshrl.u32 %v315, 7
      %v317 = vsub.s32 0, %v316
      %v318 = vrot.slane %v313, %v317
      %v320 = vadd.f32 %v311, %v318
      %v321 = vadd.f32 %v312, %v318
      %v322 = vadd.f32 %v320, %v303
      %v323 = vadd.f32 %v321, %v308
      %v324 = vld [vmem:[%s5] sm:$0xff]
      %v325 = vld [vmem:[%s5 + $0x8] sm:$0xff]
      %v326 = vld [vmem:[%s5 + $0x10] sm:$0xff]
      %v327 = vld [vmem:[%s5 + $0x18] sm:$0xff]
      %v329 = vsel %vm44, %v322, 0
      %v332 = vsel %vm44, %v323, 0
      %334 = vmatprep.subr.mxu0 0.0
      %335 = vmatpush1.msra.mxu0 %v324
      %336 = vmatprep.subr.mxu0 0.0
      %337 = vmatpush1.msra.mxu0 %v325
      %338 = vmatprep.subr.mxu0 0.0
      %339 = vmatpush1.msra.mxu0 %v326
      %340 = vmatprep.subr.mxu0 0.0
      %341 = vmatpush1.msra.mxu0 %v327
      %342 = vmatprep.subr.mxu0 0.0
      %343 = vmatpush1.msra.mxu0 0.0
      %344 = vmatprep.subr.mxu0 0.0
      %345 = vmatpush1.msra.mxu0 0.0
      %346 = vmatprep.subr.mxu0 0.0
      %347 = vmatpush1.msra.mxu0 0.0
      %348 = vmatprep.subr.mxu0 0.0
      %349 = vmatpush1.msra.mxu0 0.0
      %350 = vmatprep.subr.mxu0 0.0
      %351 = vmatpush1.msra.mxu0 0.0
      %352 = vmatprep.subr.mxu0 0.0
      %353 = vmatpush1.msra.mxu0 0.0
      %354 = vmatprep.subr.mxu0 0.0
      %355 = vmatpush1.msra.mxu0 0.0
      %356 = vmatprep.subr.mxu0 0.0
      %357 = vmatpush1.msra.mxu0 0.0
      %358 = vmatprep.subr.mxu0 0.0
      %359 = vmatpush1.msra.mxu0 0.0
      %360 = vmatprep.subr.mxu0 0.0
      %361 = vmatpush1.msra.mxu0 0.0
      %362 = vmatprep.subr.mxu0 0.0
      %363 = vmatpush1.msra.mxu0 0.0
      %364 = vmatprep.subr.mxu0 0.0
      %365 = vmatpush1.msra.mxu0 0.0
      %366 = vmatprep.subr.mxu0 0.0
      %367 = vmatpush1.msra.mxu0 0.0
      %368 = vmatprep.subr.mxu0 0.0
      %369 = vmatpush1.msra.mxu0 0.0
      %370 = vmatprep.subr.mxu0 0.0
      %371 = vmatpush1.msra.mxu0 0.0
      %372 = vmatprep.subr.mxu0 0.0
      %373 = vmatpush1.msra.mxu0 0.0
      %374 = vmatprep.subr.mxu0 0.0
      %375 = vmatpush1.msra.mxu0 0.0
      %376 = vmatprep.subr.mxu0 0.0
      %377 = vmatpush1.msra.mxu0 0.0
      %378 = vmatprep.subr.mxu0 0.0
      %379 = vmatpush1.msra.mxu0 0.0
      %380 = vmatprep.subr.mxu0 0.0
      %381 = vmatpush1.msra.mxu0 0.0
      %382 = vmatprep.subr.mxu0 0.0
      %383 = vmatpush1.msra.mxu0 0.0
      %384 = vmatprep.subr.mxu0 0.0
      %385 = vmatpush1.msra.mxu0 0.0
      %386 = vmatprep.subr.mxu0 0.0
      %387 = vmatpush1.msra.mxu0 0.0
      %388 = vmatprep.subr.mxu0 0.0
      %389 = vmatpush1.msra.mxu0 0.0
      %390 = vmatprep.subr.mxu0 0.0
      %391 = vmatpush1.msra.mxu0 0.0
      %392 = vmatprep.subr.mxu0 0.0
      %393 = vmatpush1.msra.mxu0 0.0
      %394 = vmatprep.subr.mxu0 0.0
      %395 = vmatpush1.msra.mxu0 0.0
      %396 = vmatprep.subr.mxu0 0.0
      %397 = vmatpush1.msra.mxu0 0.0
      %398 = vmatprep.mubr.f32.mxu0 0.0
      %399 = vmatmul.mubr.f32.gmra.mrb[0].mxu0 %v329
      %v400 = vpop.f32.mrb[0].mxu0
      %v401 = vadd.f32 0.0, %v400
      %v402 = vpop.f32.mrb[0].mxu0
      %403 = vmatprep.mubr.f32.mxu0 0.0
      %404 = vmatmul.mubr.f32.gmra.mrb[0].mxu0 %v332
      %v405 = vpop.f32.mrb[0].mxu0
      %v406 = vadd.f32 0.0, %v405
      %v407 = vpop.f32.mrb[0].mxu0
      %408 = vdwg.mxu0
      %v409 = vld [vmem:[%s6] sm:$0xff]
      %v410 = vld [vmem:[%s6 + $0x8] sm:$0xff]
      %v411 = vld [vmem:[%s6 + $0x10] sm:$0xff]
      %v412 = vld [vmem:[%s6 + $0x18] sm:$0xff]
      %v413 = vld [vmem:[%s6 + $0x20] sm:$0xff]
      %v414 = vld [vmem:[%s6 + $0x28] sm:$0xff]
      %v415 = vld [vmem:[%s6 + $0x30] sm:$0xff]
      %v416 = vld [vmem:[%s6 + $0x38] sm:$0xff]
      %v417 = vld [vmem:[%s6 + $0x40] sm:$0xff]
      %v418 = vld [vmem:[%s6 + $0x48] sm:$0xff]
      %v419 = vld [vmem:[%s6 + $0x50] sm:$0xff]
      %v420 = vld [vmem:[%s6 + $0x58] sm:$0xff]
      %v421 = vld [vmem:[%s6 + $0x60] sm:$0xff]
      %v422 = vld [vmem:[%s6 + $0x68] sm:$0xff]
      %v423 = vld [vmem:[%s6 + $0x70] sm:$0xff]
      %v424 = vld [vmem:[%s6 + $0x78] sm:$0xff]
      %425 = vmatprep.subr.mxu0 0.0
      %426 = vmatpush1.msra.mxu0 %v409
      %427 = vmatprep.subr.mxu0 0.0
      %428 = vmatpush1.msra.mxu0 %v410
      %429 = vmatprep.subr.mxu0 0.0
      %430 = vmatpush1.msra.mxu0 %v411
      %431 = vmatprep.subr.mxu0 0.0
      %432 = vmatpush1.msra.mxu0 %v412
      %433 = vmatprep.subr.mxu0 0.0
      %434 = vmatpush1.msra.mxu0 %v413
      %435 = vmatprep.subr.mxu0 0.0
      %436 = vmatpush1.msra.mxu0 %v414
      %437 = vmatprep.subr.mxu0 0.0
      %438 = vmatpush1.msra.mxu0 %v415
      %439 = vmatprep.subr.mxu0 0.0
      %440 = vmatpush1.msra.mxu0 %v416
      %441 = vmatprep.subr.mxu0 0.0
      %442 = vmatpush1.msra.mxu0 %v417
      %443 = vmatprep.subr.mxu0 0.0
      %444 = vmatpush1.msra.mxu0 %v418
      %445 = vmatprep.subr.mxu0 0.0
      %446 = vmatpush1.msra.mxu0 %v419
      %447 = vmatprep.subr.mxu0 0.0
      %448 = vmatpush1.msra.mxu0 %v420
      %449 = vmatprep.subr.mxu0 0.0
      %450 = vmatpush1.msra.mxu0 %v421
      %451 = vmatprep.subr.mxu0 0.0
      %452 = vmatpush1.msra.mxu0 %v422
      %453 = vmatprep.subr.mxu0 0.0
      %454 = vmatpush1.msra.mxu0 %v423
      %455 = vmatprep.subr.mxu0 0.0
      %456 = vmatpush1.msra.mxu0 %v424
      %457 = vmatprep.subr.mxu0 0.0
      %458 = vmatpush1.msra.mxu0 0.0
      %459 = vmatprep.subr.mxu0 0.0
      %460 = vmatpush1.msra.mxu0 0.0
      %461 = vmatprep.subr.mxu0 0.0
      %462 = vmatpush1.msra.mxu0 0.0
      %463 = vmatprep.subr.mxu0 0.0
      %464 = vmatpush1.msra.mxu0 0.0
      %465 = vmatprep.subr.mxu0 0.0
      %466 = vmatpush1.msra.mxu0 0.0
      %467 = vmatprep.subr.mxu0 0.0
      %468 = vmatpush1.msra.mxu0 0.0
      %469 = vmatprep.subr.mxu0 0.0
      %470 = vmatpush1.msra.mxu0 0.0
      %471 = vmatprep.subr.mxu0 0.0
      %472 = vmatpush1.msra.mxu0 0.0
      %473 = vmatprep.subr.mxu0 0.0
      %474 = vmatpush1.msra.mxu0 0.0
      %475 = vmatprep.subr.mxu0 0.0
      %476 = vmatpush1.msra.mxu0 0.0
      %477 = vmatprep.subr.mxu0 0.0
      %478 = vmatpush1.msra.mxu0 0.0
      %479 = vmatprep.subr.mxu0 0.0
      %480 = vmatpush1.msra.mxu0 0.0
      %481 = vmatprep.subr.mxu0 0.0
      %482 = vmatpush1.msra.mxu0 0.0
      %483 = vmatprep.subr.mxu0 0.0
      %484 = vmatpush1.msra.mxu0 0.0
      %485 = vmatprep.subr.mxu0 0.0
      %486 = vmatpush1.msra.mxu0 0.0
      %487 = vmatprep.subr.mxu0 0.0
      %488 = vmatpush1.msra.mxu0 0.0
      %489 = vmatprep.mubr.f32.mxu0 0.0
      %490 = vmatmul.mubr.f32.gmra.mrb[0].mxu0 %v401
      %v491 = vpop.f32.mrb[0].mxu0
      %v492 = vadd.f32 0.0, %v491
      %v493 = vpop.f32.mrb[0].mxu0
      %494 = vmatprep.mubr.f32.mxu0 0.0
      %495 = vmatmul.mubr.f32.gmra.mrb[0].mxu0 %v406
      %v496 = vpop.f32.mrb[0].mxu0
      %v497 = vadd.f32 0.0, %v496
      %v498 = vpop.f32.mrb[0].mxu0
      %499 = vdwg.mxu0
      %v500 = vadd.f32 %v322, %v492
      %v501 = vadd.f32 %v323, %v497
      %502 = vst.msk [vmem:[#allocation4] sm:$0xff] %vm44, %v500
      %503 = vst.msk [vmem:[#allocation4 + $0x8] sm:$0xff] %vm44, %v501
    $region37: #{tpu_custom_call.1} parent=1 // pred_fallthru
      _
    // Predicated region
    $region38: #{tpu_custom_call.1} parent=1 // pred_check
      _
    $region39: #{tpu_custom_call.1} parent=1 // pred_check_branch
      %505 = sbr.rel (0) target = $region41
    $region40: #{tpu_custom_call.1} parent=1 // pred_region
      %s507 = ssub.s32 256, 256
      %508 = vsyncadd [#allocation5], %s507
      %s509 = sshll.u32 [#allocation4], 4
      %s510 = int_to_ptr.vmem [resolvable:$true] %s509
      %515 = dma.vmem_to_hbm [thread:$0]  %s510, 256, %s7, [#allocation5], 128, 128, 8
    $region41: #{tpu_custom_call.1} parent=1 // pred_fallthru
      _
    // Predicated region
    $region42: #{tpu_custom_call.1} parent=1 // pred_check
      _
    $region43: #{tpu_custom_call.1} parent=1 // pred_check_branch
      %517 = sbr.rel (0) target = $region45
    $region44: #{tpu_custom_call.1} parent=1 // pred_region
      %518 = dma.done [#allocation5], 256
    $region45: #{tpu_custom_call.1} parent=1 // pred_fallthru
      _
    %519 = vsyncpa [#allocation5], 1

</llo_original>
